<compile_context>
chip_gen: v7x
topology: tpu7x:2x2x1
jax: 0.10.0
libtpu: 0.0.40
codegen_flags: <defaults>
</compile_context>

<pallas_src>
import math
import numpy as np
import jax
import jax.numpy as jnp
from jax.experimental import pallas as pl
from jax.experimental.pallas import tpu as pltpu

NUM_CLASSES = 8
SCALES = (0.5, 0.75)


# --------------------------- resize / Kronecker helpers ----------------------

def _make_resize_matrix(in_size, out_size):
    """Interpolation matrix matching F.interpolate(bilinear, align_corners=False).
    Returns (out_size, in_size); every row sums to 1.0."""
    dst = np.arange(out_size)
    src = (dst + 0.5) * (in_size / out_size) - 0.5
    src = np.clip(src, 0.0, in_size - 1)
    x0 = np.floor(src).astype(np.int64)
    x1 = np.minimum(x0 + 1, in_size - 1)
    w1 = (src - x0).astype(np.float32)
    w0 = (1.0 - w1).astype(np.float32)
    R = np.zeros((out_size, in_size), dtype=np.float32)
    R[dst, x0] += w0
    R[dst, x1] += w1
    return R


def _kron_pyramid_op_T(H, W, p):
    """K_p^T (HW, HW) such that for a row-major flattened slice l (1, HW):
         l @ K_p^T == flatten( up_p(down_p(unflatten(l))) )
       where down/up are bilinear resizes by factor p and back to (H, W)."""
    hs = int(math.floor(H * p))
    ws = int(math.floor(W * p))
    rh_d = _make_resize_matrix(H, hs)        # (hs, H)
    rh_u = _make_resize_matrix(hs, H)        # (H, hs)
    rw_d = _make_resize_matrix(W, ws)        # (ws, W)
    rw_u = _make_resize_matrix(ws, W)        # (W, ws)
    A = rh_u @ rh_d                          # (H, H)  composed row operator
    C = rw_u @ rw_d                          # (W, W)  composed col operator
    # P = A @ L @ C^T  ->  vec_row(P) = kron(A, C) @ vec_row(L)
    KT = np.kron(A, C).T.astype(np.float32)  # (HW, HW), right-multiply form
    return jnp.asarray(KT)


# --------------------------- fused kernel ------------------------------------

def _make_msc_kernel(n_scales):
    def kernel(x_ref, w_ref, b_ref, *rest):
        k_refs = rest[:n_scales]
        o_ref = rest[n_scales]
        # 1x1 conv in NCHW-flat layout: pixels (HW) on the lane axis.
        #   logits (N, HW) = W (N, C) @ x (C, HW) + b (N, 1)
        logits = (jnp.dot(w_ref[...], x_ref[0],
                          preferred_element_type=jnp.float32)
                  + b_ref[...])
        # Pyramid + cross-scale max, fused.  Bias passes through the composed
        # resize because every resize-matrix row sums to 1.
        m = logits
        for k in k_refs:
            p = jnp.dot(logits, k[...], preferred_element_type=jnp.float32)
            m = jnp.maximum(m, p)
        o_ref[0] = m.astype(o_ref.dtype)
    return kernel


def msc_forward(x, w_nc, bias_n, scales=SCALES):
    """MSC.forward (eval mode): max over {base(x)} U {up_p(base(down_p(x)))}."""
    B, C, H, W = x.shape
    N = w_nc.shape[0]
    HW = H * W
    x_flat = x.reshape(B, C, HW)                      # NCHW is contiguous: free
    kmats = [_kron_pyramid_op_T(H, W, p) for p in scales]
    n_scales = len(kmats)

    in_specs = [
        pl.BlockSpec((1, C, HW), lambda b: (b, 0, 0)),    # x[b]   (C, HW)
        pl.BlockSpec((N, C), lambda b: (0, 0)),           # weights (broadcast)
        pl.BlockSpec((N, 1), lambda b: (0, 0)),           # bias    (broadcast)
    ]
    for _ in range(n_scales):
        in_specs.append(pl.BlockSpec((HW, HW), lambda b: (0, 0)))  # K_p^T

    out = pl.pallas_call(
        _make_msc_kernel(n_scales),
        out_shape=jax.ShapeDtypeStruct((B, N, HW), x.dtype),
        grid=(B,),                                     # >=2 steps -> both v7x TCs
        in_specs=in_specs,
        out_specs=pl.BlockSpec((1, N, HW), lambda b: (b, 0, 0)),
        compiler_params=pltpu.CompilerParams(
            dimension_semantics=("parallel",)),
    )(x_flat, w_nc, bias_n.reshape(N, 1), *kmats)
    return out.reshape(B, N, H, W)


# --------------------------- pure-JAX reference (unfused) --------------------

def _msc_reference(x, w_nc, bias_n, scales):
    hi = jax.lax.Precision.HIGHEST
    B, C, H, W = x.shape

    def conv(z):
        return (jnp.einsum('nc,bchw->bnhw', w_nc, z, precision=hi)
                + bias_n[None, :, None, None])

    def resize(z, oh, ow):
        rh = jnp.asarray(_make_resize_matrix(z.shape[2], oh))
        rw = jnp.asarray(_make_resize_matrix(z.shape[3], ow))
        z = jnp.einsum('hk,bckw->bchw', rh, z, precision=hi)
        return jnp.einsum('bchw,vw->bchv', z, rw, precision=hi)

    outs = [conv(x)]
    for p in scales:
        hs, ws = int(math.floor(H * p)), int(math.floor(W * p))
        outs.append(resize(conv(resize(x, hs, ws)), H, W))
    return jnp.max(jnp.stack(outs), axis=0)


# --------------------------- main --------------------------------------------

if __name__ == "__main__":
    key = jax.random.PRNGKey(0)
    kx, kw, kb = jax.random.split(key, 3)

    B, C, H, W = 2, 4, 16, 16
    x = jax.random.normal(kx, (B, C, H, W), dtype=jnp.float32)

    # Deterministic synthetic "base": nn.Conv2d(C, NUM_CLASSES, kernel_size=1)
    w_nc = jax.random.normal(kw, (NUM_CLASSES, C), dtype=jnp.float32) * 0.1
    bias = jax.random.normal(kb, (NUM_CLASSES,), dtype=jnp.float32) * 0.1

    out = jax.block_until_ready(msc_forward(x, w_nc, bias))
    assert out.shape == (B, NUM_CLASSES, H, W)
    assert out.dtype == jnp.float32

    # Validate against the unfused reference (fusion via linearity only changes
    # fp rounding order).
    ref = jax.block_until_ready(_msc_reference(x, w_nc, bias, SCALES))
    err = float(jnp.max(jnp.abs(out - ref)))
    assert jnp.allclose(out, ref, atol=1e-3, rtol=1e-3), err

    print("KERNEL_OK")
</pallas_src>

<mosaic_0001>
module attributes {stable_mosaic.version = 11 : i64} {
  func.func @kernel(%arg0: i32, %arg1: memref<1x4x256xf32, #tpu.memory_space<vmem>>, %arg2: memref<8x4xf32, #tpu.memory_space<vmem>>, %arg3: memref<8x1xf32, #tpu.memory_space<vmem>>, %arg4: memref<256x256xf32, #tpu.memory_space<vmem>>, %arg5: memref<256x256xf32, #tpu.memory_space<vmem>>, %arg6: memref<1x8x256xf32, #tpu.memory_space<vmem>>) attributes {dimension_semantics = [#tpu.dimension_semantics<parallel>], iteration_bounds = array<i64: 2>, scalar_prefetch = 0 : i64, scratch_operands = 0 : i64, tpu.core_type = #tpu.core_type<tc>, window_params = [{transform_indices = @transform_0, window_bounds = array<i64: 1, 4, 256>}, {pipeline_mode = #tpu.pipeline_mode<synchronous>, transform_indices = @transform_1, window_bounds = array<i64: 8, 4>}, {pipeline_mode = #tpu.pipeline_mode<synchronous>, transform_indices = @transform_2, window_bounds = array<i64: 8, 1>}, {pipeline_mode = #tpu.pipeline_mode<synchronous>, transform_indices = @transform_3, window_bounds = array<i64: 256, 256>}, {pipeline_mode = #tpu.pipeline_mode<synchronous>, transform_indices = @transform_4, window_bounds = array<i64: 256, 256>}, {transform_indices = @transform_5, window_bounds = array<i64: 1, 8, 256>}]} {
    %c0 = arith.constant 0 : index
    %c0_0 = arith.constant 0 : index
    %0 = vector.load %arg2[%c0, %c0_0] : memref<8x4xf32, #tpu.memory_space<vmem>>, vector<8x4xf32>
    %c0_1 = arith.constant 0 : index
    %c0_2 = arith.constant 0 : index
    %c0_3 = arith.constant 0 : index
    %1 = vector.load %arg1[%c0_1, %c0_2, %c0_3] : memref<1x4x256xf32, #tpu.memory_space<vmem>>, vector<1x4x256xf32>
    %2 = vector.shape_cast %1 : vector<1x4x256xf32> to vector<4x256xf32>
    %cst = arith.constant dense<0.000000e+00> : vector<8x256xf32>
    %3 = tpu.matmul %0, %2, %cst {dimension_numbers = #tpu.dot_dimension_numbers<[1], [0], [0], [1], [0, 0, 1, 1], [], []>} : vector<8x4xf32>, vector<4x256xf32>, vector<8x256xf32> -> vector<8x256xf32>
    %c0_4 = arith.constant 0 : index
    %c0_5 = arith.constant 0 : index
    %4 = vector.load %arg3[%c0_4, %c0_5] : memref<8x1xf32, #tpu.memory_space<vmem>>, vector<8x1xf32>
    %5 = vector.broadcast %4 : vector<8x1xf32> to vector<8x256xf32>
    %6 = arith.addf %3, %5 : vector<8x256xf32>
    %c0_6 = arith.constant 0 : index
    %c0_7 = arith.constant 0 : index
    %7 = vector.load %arg4[%c0_6, %c0_7] : memref<256x256xf32, #tpu.memory_space<vmem>>, vector<256x256xf32>
    %cst_8 = arith.constant dense<0.000000e+00> : vector<8x256xf32>
    %8 = tpu.matmul %6, %7, %cst_8 {dimension_numbers = #tpu.dot_dimension_numbers<[1], [0], [0], [1], [0, 0, 1, 1], [], []>} : vector<8x256xf32>, vector<256x256xf32>, vector<8x256xf32> -> vector<8x256xf32>
    %9 = arith.maximumf %6, %8 : vector<8x256xf32>
    %c0_9 = arith.constant 0 : index
    %c0_10 = arith.constant 0 : index
    %10 = vector.load %arg5[%c0_9, %c0_10] : memref<256x256xf32, #tpu.memory_space<vmem>>, vector<256x256xf32>
    %cst_11 = arith.constant dense<0.000000e+00> : vector<8x256xf32>
    %11 = tpu.matmul %6, %10, %cst_11 {dimension_numbers = #tpu.dot_dimension_numbers<[1], [0], [0], [1], [0, 0, 1, 1], [], []>} : vector<8x256xf32>, vector<256x256xf32>, vector<8x256xf32> -> vector<8x256xf32>
    %12 = arith.maximumf %9, %11 : vector<8x256xf32>
    %c0_12 = arith.constant 0 : index
    %c0_13 = arith.constant 0 : index
    %c0_14 = arith.constant 0 : index
    %13 = vector.load %arg6[%c0_12, %c0_13, %c0_14] : memref<1x8x256xf32, #tpu.memory_space<vmem>>, vector<1x8x256xf32>
    %14 = vector.shape_cast %13 : vector<1x8x256xf32> to vector<8x256xf32>
    %15 = vector.shape_cast %12 : vector<8x256xf32> to vector<1x8x256xf32>
    tpu.vector_store %arg6[%c0_12, %c0_13, %c0_14], %15 {strides = array<i32>} : memref<1x8x256xf32, #tpu.memory_space<vmem>>, vector<1x8x256xf32>,
    return
  }
  func.func @transform_0(%arg0: i32) -> (i32, i32, i32) {
    %c0_i32 = arith.constant 0 : i32
    %c0_i32_0 = arith.constant 0 : i32
    %c0_i32_1 = arith.constant 0 : i32
    return %arg0, %c0_i32, %c0_i32_0 : i32, i32, i32
  }
  func.func @transform_1(%arg0: i32) -> (i32, i32) {
    %c0_i32 = arith.constant 0 : i32
    %c0_i32_0 = arith.constant 0 : i32
    %c0_i32_1 = arith.constant 0 : i32
    return %c0_i32, %c0_i32_0 : i32, i32
  }
  func.func @transform_2(%arg0: i32) -> (i32, i32) {
    %c0_i32 = arith.constant 0 : i32
    %c0_i32_0 = arith.constant 0 : i32
    %c0_i32_1 = arith.constant 0 : i32
    return %c0_i32, %c0_i32_0 : i32, i32
  }
  func.func @transform_3(%arg0: i32) -> (i32, i32) {
    %c0_i32 = arith.constant 0 : i32
    %c0_i32_0 = arith.constant 0 : i32
    %c0_i32_1 = arith.constant 0 : i32
    return %c0_i32, %c0_i32_0 : i32, i32
  }
  func.func @transform_4(%arg0: i32) -> (i32, i32) {
    %c0_i32 = arith.constant 0 : i32
    %c0_i32_0 = arith.constant 0 : i32
    %c0_i32_1 = arith.constant 0 : i32
    return %c0_i32, %c0_i32_0 : i32, i32
  }
  func.func @transform_5(%arg0: i32) -> (i32, i32, i32) {
    %c0_i32 = arith.constant 0 : i32
    %c0_i32_0 = arith.constant 0 : i32
    %c0_i32_1 = arith.constant 0 : i32
    return %arg0, %c0_i32, %c0_i32_0 : i32, i32, i32
  }
}

</mosaic_0001>

<llo_original>
// kernel: tpu_custom_call.1
$region0: #{tpu_custom_call.1}
  #allocation0 [shape = 'u32[]', space=smem, size = 0x4, offset = 0x4, fixed_abs, tag = 'smem constant byte address 0x4 - core index']
  #allocation1 [shape = 'u32[144,128]{1,0:T(1,128)}', space=vmem, size = 0x12000, scoped, tag = 'internal scratch']
  %s0 = inlined_call_operand.vmem [shape: f32[2,4,256], index: 0, kind: input, shape index: {}]
  %s1 = inlined_call_operand.vmem [shape: f32[8,4], index: 1, kind: input, shape index: {}]
  %s2 = inlined_call_operand.vmem [shape: f32[8,1], index: 2, kind: input, shape index: {}]
  %s3 = inlined_call_operand.hbm [shape: f32[256,256], index: 3, kind: input, shape index: {}]
  %s4 = inlined_call_operand.hbm [shape: f32[256,256], index: 4, kind: input, shape index: {}]
  %s5 = inlined_call_operand.hbm [shape: f32[2,8,256], index: 5, kind: output, shape index: {}]
  %s6 = sld [smem:[#allocation0]]
  $region61: #{tpu_custom_call.1} parent=0
    _
  %s8 = ssub.s32 1, %s6
  %s9 = scalar_select 0, %s8, %s6
  $region1: #{tpu_custom_call.1} parent=0
    #allocation2 [shape = 'u8[262144]{0}', space=vmem, size = 0x40000, scoped, tag = 'input window, operand 3, single buffered']
    #allocation3 [shape = 's32[2]{0}', space=sflag, size = 0x8, scoped, tag = 'scoped memory for tpu_custom_call.1']
    #allocation4 [shape = 's32[2]{0}', space=sflag, size = 0x8, scoped, tag = 'scoped memory for tpu_custom_call.1']
    #allocation5 [shape = 'u8[262144]{0}', space=vmem, size = 0x40000, scoped, tag = 'input window, operand 4, single buffered']
    #allocation6 [shape = 's32[1]{0}', space=sflag, size = 0x4, scoped, tag = 'scoped memory for tpu_custom_call.1']
    #allocation7 [shape = 'u8[16384]{0}', space=vmem, size = 0x4000, scoped, tag = 'output window, operand 0']
    %10 = vsyncpa [#allocation3], 0
    %11 = vsyncpa [#allocation6], 0
    %12 = vsyncpa [#allocation4], 0
    %s13 = scalar_lea.sflag [#allocation4], 1
    %14 = vsyncpa %s13, 0
    loop: start=0, step=1, limit=4
    $region2: #{tpu_custom_call.1} parent=1 // loop_pre_header
      _
    $region3: #{tpu_custom_call.1} parent=1 // loop_header
      %s16 = sphi 0, %s20
      %p17 = scmp.ge.s32.totalorder %s16, 4
      %s26 = sphi 0, %s28
      %s29 = sphi 0, %s26
      %s30 = sphi 0, %s29
      %s46 = sphi 0, %s30
      %s50 = sphi 0, %s50
      %s52 = sphi 0, %s50
      %s53 = sphi 0, %s52
      %s67 = sphi 0, %s53
      %s71 = sphi 0, %s71
      %s73 = sphi 0, %s71
      %s74 = sphi 0, %s73
      %s88 = sphi 0, %s74
      %s92 = sphi 0, %s92
      %s94 = sphi 0, %s92
      %s95 = sphi 0, %s94
      %s109 = sphi 0, %s95
      %s113 = sphi 0, %s113
      %s115 = sphi 0, %s113
      %s116 = sphi 0, %s115
      %s130 = sphi 0, %s116
      %s136 = sphi 0, %s138
      %s139 = sphi 0, %s136
      %s140 = sphi 0, %s139
      %s156 = sphi 0, %s140
    $region4: #{tpu_custom_call.1} parent=1 // loop_header_branch
      %19 = sbr.rel (%p17) target = $region8
    $region5: #{tpu_custom_call.1} parent=1 // loop_body
      %s21 = ssub.s32 %s16, 1
      %s22 = ssub.s32 %s16, 2
      %s23 = sadd.s32 %s16, 1
      %s24 = ssub.s32 %s16, %s23
      %p25 = scmp.eq.s32.totalorder %s24, 0
      %s27 = sadd.s32 %s26, 1
      %s28 = scalar_select %p25, %s26, %s27
      %p31 = pneg %p25
      %p32 = scmp.eq.s32.totalorder %s16, 1
      %p33 = por %p31, %p32
      %p34 = scmp.ne.s32.totalorder %s26, %s29
      %p35 = scmp.eq.s32.totalorder %s16, 0
      %p36 = por %p34, %p35
      %p37 = scmp.ne.s32.totalorder %s26, %s29
      %p38 = scmp.eq.s32.totalorder %s21, 1
      %p39 = por %p37, %p38
      %p40 = scmp.ne.s32.totalorder %s29, %s30
      %p41 = scmp.eq.s32.totalorder %s21, 0
      %p42 = por %p40, %p41
      %p43 = scmp.ne.s32.totalorder %s29, %s30
      %p44 = scmp.eq.s32.totalorder %s22, 1
      %p45 = por %p43, %p44
      %p47 = scmp.ne.s32.totalorder %s30, %s46
      %p48 = scmp.eq.s32.totalorder %s22, 0
      %p49 = por %p47, %p48
      %s51 = sadd.s32 %s50, 1
      %p54 = scmp.eq.s32.totalorder %s16, 1
      %p55 = scmp.ne.s32.totalorder %s50, %s52
      %p56 = scmp.eq.s32.totalorder %s16, 0
      %p57 = por %p55, %p56
      %p58 = scmp.ne.s32.totalorder %s50, %s52
      %p59 = scmp.eq.s32.totalorder %s21, 1
      %p60 = por %p58, %p59
      %p61 = scmp.ne.s32.totalorder %s52, %s53
      %p62 = scmp.eq.s32.totalorder %s21, 0
      %p63 = por %p61, %p62
      %p64 = scmp.ne.s32.totalorder %s52, %s53
      %p65 = scmp.eq.s32.totalorder %s22, 1
      %p66 = por %p64, %p65
      %p68 = scmp.ne.s32.totalorder %s53, %s67
      %p69 = scmp.eq.s32.totalorder %s22, 0
      %p70 = por %p68, %p69
      %s72 = sadd.s32 %s71, 1
      %p75 = scmp.eq.s32.totalorder %s16, 1
      %p76 = scmp.ne.s32.totalorder %s71, %s73
      %p77 = scmp.eq.s32.totalorder %s16, 0
      %p78 = por %p76, %p77
      %p79 = scmp.ne.s32.totalorder %s71, %s73
      %p80 = scmp.eq.s32.totalorder %s21, 1
      %p81 = por %p79, %p80
      %p82 = scmp.ne.s32.totalorder %s73, %s74
      %p83 = scmp.eq.s32.totalorder %s21, 0
      %p84 = por %p82, %p83
      %p85 = scmp.ne.s32.totalorder %s73, %s74
      %p86 = scmp.eq.s32.totalorder %s22, 1
      %p87 = por %p85, %p86
      %p89 = scmp.ne.s32.totalorder %s74, %s88
      %p90 = scmp.eq.s32.totalorder %s22, 0
      %p91 = por %p89, %p90
      %s93 = sadd.s32 %s92, 1
      %p96 = scmp.eq.s32.totalorder %s16, 1
      %p97 = scmp.ne.s32.totalorder %s92, %s94
      %p98 = scmp.eq.s32.totalorder %s16, 0
      %p99 = por %p97, %p98
      %p100 = scmp.ne.s32.totalorder %s92, %s94
      %p101 = scmp.eq.s32.totalorder %s21, 1
      %p102 = por %p100, %p101
      %p103 = scmp.ne.s32.totalorder %s94, %s95
      %p104 = scmp.eq.s32.totalorder %s21, 0
      %p105 = por %p103, %p104
      %p106 = scmp.ne.s32.totalorder %s94, %s95
      %p107 = scmp.eq.s32.totalorder %s22, 1
      %p108 = por %p106, %p107
      %p110 = scmp.ne.s32.totalorder %s95, %s109
      %p111 = scmp.eq.s32.totalorder %s22, 0
      %p112 = por %p110, %p111
      %s114 = sadd.s32 %s113, 1
      %p117 = scmp.eq.s32.totalorder %s16, 1
      %p118 = scmp.ne.s32.totalorder %s113, %s115
      %p119 = scmp.eq.s32.totalorder %s16, 0
      %p120 = por %p118, %p119
      %p121 = scmp.ne.s32.totalorder %s113, %s115
      %p122 = scmp.eq.s32.totalorder %s21, 1
      %p123 = por %p121, %p122
      %p124 = scmp.ne.s32.totalorder %s115, %s116
      %p125 = scmp.eq.s32.totalorder %s21, 0
      %p126 = por %p124, %p125
      %p127 = scmp.ne.s32.totalorder %s115, %s116
      %p128 = scmp.eq.s32.totalorder %s22, 1
      %p129 = por %p127, %p128
      %p131 = scmp.ne.s32.totalorder %s116, %s130
      %p132 = scmp.eq.s32.totalorder %s22, 0
      %p133 = por %p131, %p132
      %s134 = ssub.s32 %s16, %s23
      %p135 = scmp.eq.s32.totalorder %s134, 0
      %s137 = sadd.s32 %s136, 1
      %s138 = scalar_select %p135, %s136, %s137
      %p141 = pneg %p135
      %p142 = scmp.eq.s32.totalorder %s16, 1
      %p143 = por %p141, %p142
      %p144 = scmp.ne.s32.totalorder %s136, %s139
      %p145 = scmp.eq.s32.totalorder %s16, 0
      %p146 = por %p144, %p145
      %p147 = scmp.ne.s32.totalorder %s136, %s139
      %p148 = scmp.eq.s32.totalorder %s21, 1
      %p149 = por %p147, %p148
      %p150 = scmp.ne.s32.totalorder %s139, %s140
      %p151 = scmp.eq.s32.totalorder %s21, 0
      %p152 = por %p150, %p151
      %p153 = scmp.ne.s32.totalorder %s139, %s140
      %p154 = scmp.eq.s32.totalorder %s22, 1
      %p155 = por %p153, %p154
      %p157 = scmp.ne.s32.totalorder %s140, %s156
      %p158 = scmp.eq.s32.totalorder %s22, 0
      %p159 = por %p157, %p158
      %p160 = scmp.le.s32.totalorder 1, %s16
      %p161 = scmp.lt.s32.totalorder %s16, 3
      %p162 = pnand %p160, %p161
      %p163 = pneg %p162
      // Predicated region
      $region9: #{tpu_custom_call.1} parent=5 // pred_check
        _
      $region10: #{tpu_custom_call.1} parent=5 // pred_check_branch
        %165 = sbr.rel (%p162) target = $region12
      $region11: #{tpu_custom_call.1} parent=5 // pred_region
        %s166 = ssub.s32 %s16, 1
        // Predicated region
        $region13: #{tpu_custom_call.1} parent=11 // pred_check
          %p167 = pneg %p63
        $region14: #{tpu_custom_call.1} parent=11 // pred_check_branch
          %169 = sbr.rel (%p167) target = $region16
        $region15: #{tpu_custom_call.1} parent=11 // pred_region
          _
        $region16: #{tpu_custom_call.1} parent=11 // pred_fallthru
          _
        // Predicated region
        $region17: #{tpu_custom_call.1} parent=11 // pred_check
          %p170 = pneg %p84
        $region18: #{tpu_custom_call.1} parent=11 // pred_check_branch
          %172 = sbr.rel (%p170) target = $region20
        $region19: #{tpu_custom_call.1} parent=11 // pred_region
          _
        $region20: #{tpu_custom_call.1} parent=11 // pred_fallthru
          _
        // Predicated region
        $region21: #{tpu_custom_call.1} parent=11 // pred_check
          %p173 = pneg %p105
        $region22: #{tpu_custom_call.1} parent=11 // pred_check_branch
          %175 = sbr.rel (%p173) target = $region24
        $region23: #{tpu_custom_call.1} parent=11 // pred_region
          %s177 = ssub.s32 8192, 8192
          %178 = vsyncadd [#allocation3], %s177
          %s179 = sshll.u32 [#allocation2], 4
          %s180 = int_to_ptr.vmem [resolvable:$true] %s179
          %185 = dma.hbm_to_vmem [thread:$0]  %s3, 8192, %s180, [#allocation3], 256, 256, 16
        $region24: #{tpu_custom_call.1} parent=11 // pred_fallthru
          _
        // Predicated region
        $region25: #{tpu_custom_call.1} parent=11 // pred_check
          %p186 = pneg %p126
        $region26: #{tpu_custom_call.1} parent=11 // pred_check_branch
          %188 = sbr.rel (%p186) target = $region28
        $region27: #{tpu_custom_call.1} parent=11 // pred_region
          %s190 = ssub.s32 8192, 8192
          %191 = vsyncadd [#allocation6], %s190
          %s192 = sshll.u32 [#allocation5], 4
          %s193 = int_to_ptr.vmem [resolvable:$true] %s192
          %198 = dma.hbm_to_vmem [thread:$0]  %s4, 8192, %s193, [#allocation6], 256, 256, 16
        $region28: #{tpu_custom_call.1} parent=11 // pred_fallthru
          _
      $region12: #{tpu_custom_call.1} parent=5 // pred_fallthru
        _
      %p199 = scmp.lt.s32.totalorder %s16, 2
      // Predicated region
      $region29: #{tpu_custom_call.1} parent=5 // pred_check
        %p200 = pneg %p199
      $region30: #{tpu_custom_call.1} parent=5 // pred_check_branch
        %202 = sbr.rel (%p200) target = $region32
      $region31: #{tpu_custom_call.1} parent=5 // pred_region
        // Predicated region
        $region33: #{tpu_custom_call.1} parent=31 // pred_check
          %p203 = pneg %p36
        $region34: #{tpu_custom_call.1} parent=31 // pred_check_branch
          %205 = sbr.rel (%p203) target = $region36
        $region35: #{tpu_custom_call.1} parent=31 // pred_region
          %p206 = scmp.lt.s32.totalorder %s16, 1
          %s207 = scalar_select %p206, %s16, 1
          %s208 = smul.addr %s207, 2
          %s209 = smul.addr %s208, 4
          %s210 = scalar_lea.vmem %s0, %s209
        $region36: #{tpu_custom_call.1} parent=31 // pred_fallthru
          _
      $region32: #{tpu_custom_call.1} parent=5 // pred_fallthru
        _
      %p211 = scmp.le.s32.totalorder 1, %s16
      %p212 = scmp.lt.s32.totalorder %s16, 3
      %p213 = pnand %p211, %p212
      %p214 = pneg %p213
      // Predicated region
      $region37: #{tpu_custom_call.1} parent=5 // pred_check
        _
      $region38: #{tpu_custom_call.1} parent=5 // pred_check_branch
        %216 = sbr.rel (%p213) target = $region40
      $region39: #{tpu_custom_call.1} parent=5 // pred_region
        %s217 = ssub.s32 %s16, 1
        // Predicated region
        $region41: #{tpu_custom_call.1} parent=39 // pred_check
          %p218 = pneg %p105
        $region42: #{tpu_custom_call.1} parent=39 // pred_check_branch
          %220 = sbr.rel (%p218) target = $region44
        $region43: #{tpu_custom_call.1} parent=39 // pred_region
          %221 = dma.done [#allocation3], 8192
        $region44: #{tpu_custom_call.1} parent=39 // pred_fallthru
          _
        // Predicated region
        $region45: #{tpu_custom_call.1} parent=39 // pred_check
          %p222 = pneg %p126
        $region46: #{tpu_custom_call.1} parent=39 // pred_check_branch
          %224 = sbr.rel (%p222) target = $region48
        $region47: #{tpu_custom_call.1} parent=39 // pred_region
          %225 = dma.done [#allocation6], 8192
        $region48: #{tpu_custom_call.1} parent=39 // pred_fallthru
          _
        %p226 = scmp.lt.s32.totalorder %s21, 1
        %s227 = scalar_select %p226, %s21, 1
        %s228 = smul.addr %s227, 2
        %s229 = smul.addr %s228, 4
        %s230 = scalar_lea.vmem %s0, %s229
        %p231 = pneg %p42
        %p232 = pneg %p39
        %p233 = pneg %p63
        %p234 = pneg %p60
        %p235 = pneg %p84
        %p236 = pneg %p81
        %p237 = pneg %p105
        %p238 = pneg %p102
        %p239 = pneg %p126
        %p240 = pneg %p123
        %p241 = pneg %p152
        %p242 = pneg %p149
        %s243 = sand.u32 %s139, 1
        %s244 = scalar_lea.sflag [#allocation4], %s243
        %s245 = sand.u32 %s139, 1
        %s246 = smul.addr %s245, 16
        %s247 = scalar_lea.vmem [#allocation7], %s246
        %p248 = scmp.lt.s32.totalorder %s21, 1
        %s249 = scalar_select %p248, %s21, 1
        %s250 = smul.addr %s249, 2
        %s251 = smul.addr %s250, 4
        %s252 = scalar_lea.vmem %s0, %s251
        %v253 = vld [vmem:[%s1] sm:$0xff]
        %v254 = vld [vmem:[%s252] sm:$0xff]
        %v255 = vld [vmem:[%s2] sm:$0xff]
        %257 = vset.pattern.permute.xlu0 0
        %258 = vperm.xlu0 %257, %v255
        %v259 = vpop.permute.xlu0 %258
        %v262 = vcombine.high %v254, %v254
        %vm263 = vcmask 31744
        %v265 = vsel %vm263, %v253, 0
        %vm267 = vcmask 1043456
        %v268 = vsel %vm267, %v254, 0
        %v270 = vsel %vm267, %v262, 0
        %272 = vmatprep.subr.mxu0 %v270
        %273 = vmatpush1.msra.mxu0 %v268
        %274 = vmatprep.subr.mxu0 0.0
        %275 = vmatpush1.msra.mxu0 0.0
        %276 = vmatprep.subr.mxu0 0.0
        %277 = vmatpush1.msra.mxu0 0.0
        %278 = vmatprep.subr.mxu0 0.0
        %279 = vmatpush1.msra.mxu0 0.0
        %280 = vmatprep.subr.mxu0 0.0
        %281 = vmatpush1.msra.mxu0 0.0
        %282 = vmatprep.subr.mxu0 0.0
        %283 = vmatpush1.msra.mxu0 0.0
        %284 = vmatprep.subr.mxu0 0.0
        %285 = vmatpush1.msra.mxu0 0.0
        %286 = vmatprep.subr.mxu0 0.0
        %287 = vmatpush1.msra.mxu0 0.0
        %288 = vmatprep.subr.mxu0 0.0
        %289 = vmatpush1.msra.mxu0 0.0
        %290 = vmatprep.subr.mxu0 0.0
        %291 = vmatpush1.msra.mxu0 0.0
        %292 = vmatprep.subr.mxu0 0.0
        %293 = vmatpush1.msra.mxu0 0.0
        %294 = vmatprep.subr.mxu0 0.0
        %295 = vmatpush1.msra.mxu0 0.0
        %296 = vmatprep.subr.mxu0 0.0
        %297 = vmatpush1.msra.mxu0 0.0
        %298 = vmatprep.subr.mxu0 0.0
        %299 = vmatpush1.msra.mxu0 0.0
        %300 = vmatprep.subr.mxu0 0.0
        %301 = vmatpush1.msra.mxu0 0.0
        %302 = vmatprep.subr.mxu0 0.0
        %303 = vmatpush1.msra.mxu0 0.0
        %304 = vmatprep.subr.mxu0 0.0
        %305 = vmatpush1.msra.mxu0 0.0
        %306 = vmatprep.subr.mxu0 0.0
        %307 = vmatpush1.msra.mxu0 0.0
        %308 = vmatprep.subr.mxu0 0.0
        %309 = vmatpush1.msra.mxu0 0.0
        %310 = vmatprep.subr.mxu0 0.0
        %311 = vmatpush1.msra.mxu0 0.0
        %312 = vmatprep.subr.mxu0 0.0
        %313 = vmatpush1.msra.mxu0 0.0
        %314 = vmatprep.subr.mxu0 0.0
        %315 = vmatpush1.msra.mxu0 0.0
        %316 = vmatprep.subr.mxu0 0.0
        %317 = vmatpush1.msra.mxu0 0.0
        %318 = vmatprep.subr.mxu0 0.0
        %319 = vmatpush1.msra.mxu0 0.0
        %320 = vmatprep.subr.mxu0 0.0
        %321 = vmatpush1.msra.mxu0 0.0
        %322 = vmatprep.subr.mxu0 0.0
        %323 = vmatpush1.msra.mxu0 0.0
        %324 = vmatprep.subr.mxu0 0.0
        %325 = vmatpush1.msra.mxu0 0.0
        %326 = vmatprep.subr.mxu0 0.0
        %327 = vmatpush1.msra.mxu0 0.0
        %328 = vmatprep.subr.mxu0 0.0
        %329 = vmatpush1.msra.mxu0 0.0
        %330 = vmatprep.subr.mxu0 0.0
        %331 = vmatpush1.msra.mxu0 0.0
        %332 = vmatprep.subr.mxu0 0.0
        %333 = vmatpush1.msra.mxu0 0.0
        %334 = vmatprep.subr.mxu0 0.0
        %335 = vmatpush1.msra.mxu0 0.0
        %336 = vmatprep.mubr.f32.mxu0 0.0
        %337 = vmatmul.mubr.f32.gmra.mrb[0].mxu0 %v265
        %v338 = vpop.f32.mrb[0].mxu0
        %v339 = vadd.f32 %v259, %v338
        %v340 = vpop.f32.mrb[0].mxu0
        %v341 = vadd.f32 %v259, %v340
        %342 = vdwg.mxu0
        %v343 = vld [vmem:[#allocation2] sm:$0xff]
        %v344 = vld [vmem:[#allocation2 + $0x8] sm:$0xff]
        %v345 = vld [vmem:[#allocation2 + $0x10] sm:$0xff]
        %v346 = vld [vmem:[#allocation2 + $0x18] sm:$0xff]
        %v347 = vld [vmem:[#allocation2 + $0x20] sm:$0xff]
        %v348 = vld [vmem:[#allocation2 + $0x28] sm:$0xff]
        %v349 = vld [vmem:[#allocation2 + $0x30] sm:$0xff]
        %v350 = vld [vmem:[#allocation2 + $0x38] sm:$0xff]
        %v351 = vld [vmem:[#allocation2 + $0x40] sm:$0xff]
        %v352 = vld [vmem:[#allocation2 + $0x48] sm:$0xff]
        %v353 = vld [vmem:[#allocation2 + $0x50] sm:$0xff]
        %v354 = vld [vmem:[#allocation2 + $0x58] sm:$0xff]
        %v355 = vld [vmem:[#allocation2 + $0x60] sm:$0xff]
        %v356 = vld [vmem:[#allocation2 + $0x68] sm:$0xff]
        %v357 = vld [vmem:[#allocation2 + $0x70] sm:$0xff]
        %v358 = vld [vmem:[#allocation2 + $0x78] sm:$0xff]
        %v359 = vld [vmem:[#allocation2 + $0x80] sm:$0xff]
        %v360 = vld [vmem:[#allocation2 + $0x88] sm:$0xff]
        %v361 = vld [vmem:[#allocation2 + $0x90] sm:$0xff]
        %v362 = vld [vmem:[#allocation2 + $0x98] sm:$0xff]
        %v363 = vld [vmem:[#allocation2 + $0xa0] sm:$0xff]
        %v364 = vld [vmem:[#allocation2 + $0xa8] sm:$0xff]
        %v365 = vld [vmem:[#allocation2 + $0xb0] sm:$0xff]
        %v366 = vld [vmem:[#allocation2 + $0xb8] sm:$0xff]
        %v367 = vld [vmem:[#allocation2 + $0xc0] sm:$0xff]
        %v368 = vld [vmem:[#allocation2 + $0xc8] sm:$0xff]
        %v369 = vld [vmem:[#allocation2 + $0xd0] sm:$0xff]
        %v370 = vld [vmem:[#allocation2 + $0xd8] sm:$0xff]
        %v371 = vld [vmem:[#allocation2 + $0xe0] sm:$0xff]
        %v372 = vld [vmem:[#allocation2 + $0xe8] sm:$0xff]
        %v373 = vld [vmem:[#allocation2 + $0xf0] sm:$0xff]
        %v374 = vld [vmem:[#allocation2 + $0xf8] sm:$0xff]
        %v375 = vld [vmem:[#allocation2 + $0x100] sm:$0xff]
        %v376 = vld [vmem:[#allocation2 + $0x108] sm:$0xff]
        %v377 = vld [vmem:[#allocation2 + $0x110] sm:$0xff]
        %v378 = vld [vmem:[#allocation2 + $0x118] sm:$0xff]
        %v379 = vld [vmem:[#allocation2 + $0x120] sm:$0xff]
        %v380 = vld [vmem:[#allocation2 + $0x128] sm:$0xff]
        %v381 = vld [vmem:[#allocation2 + $0x130] sm:$0xff]
        %v382 = vld [vmem:[#allocation2 + $0x138] sm:$0xff]
        %v383 = vld [vmem:[#allocation2 + $0x140] sm:$0xff]
        %v384 = vld [vmem:[#allocation2 + $0x148] sm:$0xff]
        %v385 = vld [vmem:[#allocation2 + $0x150] sm:$0xff]
        %v386 = vld [vmem:[#allocation2 + $0x158] sm:$0xff]
        %v387 = vld [vmem:[#allocation2 + $0x160] sm:$0xff]
        %v388 = vld [vmem:[#allocation2 + $0x168] sm:$0xff]
        %v389 = vld [vmem:[#allocation2 + $0x170] sm:$0xff]
        %v390 = vld [vmem:[#allocation2 + $0x178] sm:$0xff]
        %v391 = vld [vmem:[#allocation2 + $0x180] sm:$0xff]
        %v392 = vld [vmem:[#allocation2 + $0x188] sm:$0xff]
        %v393 = vld [vmem:[#allocation2 + $0x190] sm:$0xff]
        %v394 = vld [vmem:[#allocation2 + $0x198] sm:$0xff]
        %v395 = vld [vmem:[#allocation2 + $0x1a0] sm:$0xff]
        %v396 = vld [vmem:[#allocation2 + $0x1a8] sm:$0xff]
        %v397 = vld [vmem:[#allocation2 + $0x1b0] sm:$0xff]
        %v398 = vld [vmem:[#allocation2 + $0x1b8] sm:$0xff]
        %v399 = vld [vmem:[#allocation2 + $0x1c0] sm:$0xff]
        %v400 = vld [vmem:[#allocation2 + $0x1c8] sm:$0xff]
        %v401 = vld [vmem:[#allocation2 + $0x1d0] sm:$0xff]
        %v402 = vld [vmem:[#allocation2 + $0x1d8] sm:$0xff]
        %v403 = vld [vmem:[#allocation2 + $0x1e0] sm:$0xff]
        %v404 = vld [vmem:[#allocation2 + $0x1e8] sm:$0xff]
        %v405 = vld [vmem:[#allocation2 + $0x1f0] sm:$0xff]
        %v406 = vld [vmem:[#allocation2 + $0x1f8] sm:$0xff]
        %407 = vmatprep.subr.mxu0 %v344
        %408 = vmatpush1.msra.mxu0 %v343
        %409 = vmatprep.subr.mxu0 %v346
        %410 = vmatpush1.msra.mxu0 %v345
        %411 = vmatprep.subr.mxu0 %v348
        %412 = vmatpush1.msra.mxu0 %v347
        %413 = vmatprep.subr.mxu0 %v350
        %414 = vmatpush1.msra.mxu0 %v349
        %415 = vmatprep.subr.mxu0 %v352
        %416 = vmatpush1.msra.mxu0 %v351
        %417 = vmatprep.subr.mxu0 %v354
        %418 = vmatpush1.msra.mxu0 %v353
        %419 = vmatprep.subr.mxu0 %v356
        %420 = vmatpush1.msra.mxu0 %v355
        %421 = vmatprep.subr.mxu0 %v358
        %422 = vmatpush1.msra.mxu0 %v357
        %423 = vmatprep.subr.mxu0 %v360
        %424 = vmatpush1.msra.mxu0 %v359
        %425 = vmatprep.subr.mxu0 %v362
        %426 = vmatpush1.msra.mxu0 %v361
        %427 = vmatprep.subr.mxu0 %v364
        %428 = vmatpush1.msra.mxu0 %v363
        %429 = vmatprep.subr.mxu0 %v366
        %430 = vmatpush1.msra.mxu0 %v365
        %431 = vmatprep.subr.mxu0 %v368
        %432 = vmatpush1.msra.mxu0 %v367
        %433 = vmatprep.subr.mxu0 %v370
        %434 = vmatpush1.msra.mxu0 %v369
        %435 = vmatprep.subr.mxu0 %v372
        %436 = vmatpush1.msra.mxu0 %v371
        %437 = vmatprep.subr.mxu0 %v374
        %438 = vmatpush1.msra.mxu0 %v373
        %439 = vmatprep.subr.mxu0 %v376
        %440 = vmatpush1.msra.mxu0 %v375
        %441 = vmatprep.subr.mxu0 %v378
        %442 = vmatpush1.msra.mxu0 %v377
        %443 = vmatprep.subr.mxu0 %v380
        %444 = vmatpush1.msra.mxu0 %v379
        %445 = vmatprep.subr.mxu0 %v382
        %446 = vmatpush1.msra.mxu0 %v381
        %447 = vmatprep.subr.mxu0 %v384
        %448 = vmatpush1.msra.mxu0 %v383
        %449 = vmatprep.subr.mxu0 %v386
        %450 = vmatpush1.msra.mxu0 %v385
        %451 = vmatprep.subr.mxu0 %v388
        %452 = vmatpush1.msra.mxu0 %v387
        %453 = vmatprep.subr.mxu0 %v390
        %454 = vmatpush1.msra.mxu0 %v389
        %455 = vmatprep.subr.mxu0 %v392
        %456 = vmatpush1.msra.mxu0 %v391
        %457 = vmatprep.subr.mxu0 %v394
        %458 = vmatpush1.msra.mxu0 %v393
        %459 = vmatprep.subr.mxu0 %v396
        %460 = vmatpush1.msra.mxu0 %v395
        %461 = vmatprep.subr.mxu0 %v398
        %462 = vmatpush1.msra.mxu0 %v397
        %463 = vmatprep.subr.mxu0 %v400
        %464 = vmatpush1.msra.mxu0 %v399
        %465 = vmatprep.subr.mxu0 %v402
        %466 = vmatpush1.msra.mxu0 %v401
        %467 = vmatprep.subr.mxu0 %v404
        %468 = vmatpush1.msra.mxu0 %v403
        %469 = vmatprep.subr.mxu0 %v406
        %470 = vmatpush1.msra.mxu0 %v405
        %471 = vmatprep.mubr.f32.mxu0 %v341
        %472 = vmatmul.mubr.f32.gmra.mrb[0].mxu0 %v339
        %v473 = vpop.f32.mrb[0].mxu0
        %v474 = vadd.f32 0.0, %v473
        %v475 = vpop.f32.mrb[0].mxu0
        %v476 = vadd.f32 0.0, %v475
        %477 = vdwg.mxu0
        %v478 = vmax.f32 %v339, %v474
        %v479 = vmax.f32 %v341, %v476
        %v480 = vld [vmem:[#allocation5] sm:$0xff]
        %v481 = vld [vmem:[#allocation5 + $0x8] sm:$0xff]
        %v482 = vld [vmem:[#allocation5 + $0x10] sm:$0xff]
        %v483 = vld [vmem:[#allocation5 + $0x18] sm:$0xff]
        %v484 = vld [vmem:[#allocation5 + $0x20] sm:$0xff]
        %v485 = vld [vmem:[#allocation5 + $0x28] sm:$0xff]
        %v486 = vld [vmem:[#allocation5 + $0x30] sm:$0xff]
        %v487 = vld [vmem:[#allocation5 + $0x38] sm:$0xff]
        %v488 = vld [vmem:[#allocation5 + $0x40] sm:$0xff]
        %v489 = vld [vmem:[#allocation5 + $0x48] sm:$0xff]
        %v490 = vld [vmem:[#allocation5 + $0x50] sm:$0xff]
        %v491 = vld [vmem:[#allocation5 + $0x58] sm:$0xff]
        %v492 = vld [vmem:[#allocation5 + $0x60] sm:$0xff]
        %v493 = vld [vmem:[#allocation5 + $0x68] sm:$0xff]
        %v494 = vld [vmem:[#allocation5 + $0x70] sm:$0xff]
        %v495 = vld [vmem:[#allocation5 + $0x78] sm:$0xff]
        %v496 = vld [vmem:[#allocation5 + $0x80] sm:$0xff]
        %v497 = vld [vmem:[#allocation5 + $0x88] sm:$0xff]
        %v498 = vld [vmem:[#allocation5 + $0x90] sm:$0xff]
        %v499 = vld [vmem:[#allocation5 + $0x98] sm:$0xff]
        %v500 = vld [vmem:[#allocation5 + $0xa0] sm:$0xff]
        %v501 = vld [vmem:[#allocation5 + $0xa8] sm:$0xff]
        %v502 = vld [vmem:[#allocation5 + $0xb0] sm:$0xff]
        %v503 = vld [vmem:[#allocation5 + $0xb8] sm:$0xff]
        %v504 = vld [vmem:[#allocation5 + $0xc0] sm:$0xff]
        %v505 = vld [vmem:[#allocation5 + $0xc8] sm:$0xff]
        %v506 = vld [vmem:[#allocation5 + $0xd0] sm:$0xff]
        %v507 = vld [vmem:[#allocation5 + $0xd8] sm:$0xff]
        %v508 = vld [vmem:[#allocation5 + $0xe0] sm:$0xff]
        %v509 = vld [vmem:[#allocation5 + $0xe8] sm:$0xff]
        %v510 = vld [vmem:[#allocation5 + $0xf0] sm:$0xff]
        %v511 = vld [vmem:[#allocation5 + $0xf8] sm:$0xff]
        %v512 = vld [vmem:[#allocation5 + $0x100] sm:$0xff]
        %v513 = vld [vmem:[#allocation5 + $0x108] sm:$0xff]
        %v514 = vld [vmem:[#allocation5 + $0x110] sm:$0xff]
        %v515 = vld [vmem:[#allocation5 + $0x118] sm:$0xff]
        %v516 = vld [vmem:[#allocation5 + $0x120] sm:$0xff]
        %v517 = vld [vmem:[#allocation5 + $0x128] sm:$0xff]
        %v518 = vld [vmem:[#allocation5 + $0x130] sm:$0xff]
        %v519 = vld [vmem:[#allocation5 + $0x138] sm:$0xff]
        %v520 = vld [vmem:[#allocation5 + $0x140] sm:$0xff]
        %v521 = vld [vmem:[#allocation5 + $0x148] sm:$0xff]
        %v522 = vld [vmem:[#allocation5 + $0x150] sm:$0xff]
        %v523 = vld [vmem:[#allocation5 + $0x158] sm:$0xff]
        %v524 = vld [vmem:[#allocation5 + $0x160] sm:$0xff]
        %v525 = vld [vmem:[#allocation5 + $0x168] sm:$0xff]
        %v526 = vld [vmem:[#allocation5 + $0x170] sm:$0xff]
        %v527 = vld [vmem:[#allocation5 + $0x178] sm:$0xff]
        %v528 = vld [vmem:[#allocation5 + $0x180] sm:$0xff]
        %v529 = vld [vmem:[#allocation5 + $0x188] sm:$0xff]
        %v530 = vld [vmem:[#allocation5 + $0x190] sm:$0xff]
        %v531 = vld [vmem:[#allocation5 + $0x198] sm:$0xff]
        %v532 = vld [vmem:[#allocation5 + $0x1a0] sm:$0xff]
        %v533 = vld [vmem:[#allocation5 + $0x1a8] sm:$0xff]
        %v534 = vld [vmem:[#allocation5 + $0x1b0] sm:$0xff]
        %v535 = vld [vmem:[#allocation5 + $0x1b8] sm:$0xff]
        %v536 = vld [vmem:[#allocation5 + $0x1c0] sm:$0xff]
        %v537 = vld [vmem:[#allocation5 + $0x1c8] sm:$0xff]
        %v538 = vld [vmem:[#allocation5 + $0x1d0] sm:$0xff]
        %v539 = vld [vmem:[#allocation5 + $0x1d8] sm:$0xff]
        %v540 = vld [vmem:[#allocation5 + $0x1e0] sm:$0xff]
        %v541 = vld [vmem:[#allocation5 + $0x1e8] sm:$0xff]
        %v542 = vld [vmem:[#allocation5 + $0x1f0] sm:$0xff]
        %v543 = vld [vmem:[#allocation5 + $0x1f8] sm:$0xff]
        %544 = vmatprep.subr.mxu0 %v481
        %545 = vmatpush1.msra.mxu0 %v480
        %546 = vmatprep.subr.mxu0 %v483
        %547 = vmatpush1.msra.mxu0 %v482
        %548 = vmatprep.subr.mxu0 %v485
        %549 = vmatpush1.msra.mxu0 %v484
        %550 = vmatprep.subr.mxu0 %v487
        %551 = vmatpush1.msra.mxu0 %v486
        %552 = vmatprep.subr.mxu0 %v489
        %553 = vmatpush1.msra.mxu0 %v488
        %554 = vmatprep.subr.mxu0 %v491
        %555 = vmatpush1.msra.mxu0 %v490
        %556 = vmatprep.subr.mxu0 %v493
        %557 = vmatpush1.msra.mxu0 %v492
        %558 = vmatprep.subr.mxu0 %v495
        %559 = vmatpush1.msra.mxu0 %v494
        %560 = vmatprep.subr.mxu0 %v497
        %561 = vmatpush1.msra.mxu0 %v496
        %562 = vmatprep.subr.mxu0 %v499
        %563 = vmatpush1.msra.mxu0 %v498
        %564 = vmatprep.subr.mxu0 %v501
        %565 = vmatpush1.msra.mxu0 %v500
        %566 = vmatprep.subr.mxu0 %v503
        %567 = vmatpush1.msra.mxu0 %v502
        %568 = vmatprep.subr.mxu0 %v505
        %569 = vmatpush1.msra.mxu0 %v504
        %570 = vmatprep.subr.mxu0 %v507
        %571 = vmatpush1.msra.mxu0 %v506
        %572 = vmatprep.subr.mxu0 %v509
        %573 = vmatpush1.msra.mxu0 %v508
        %574 = vmatprep.subr.mxu0 %v511
        %575 = vmatpush1.msra.mxu0 %v510
        %576 = vmatprep.subr.mxu0 %v513
        %577 = vmatpush1.msra.mxu0 %v512
        %578 = vmatprep.subr.mxu0 %v515
        %579 = vmatpush1.msra.mxu0 %v514
        %580 = vmatprep.subr.mxu0 %v517
        %581 = vmatpush1.msra.mxu0 %v516
        %582 = vmatprep.subr.mxu0 %v519
        %583 = vmatpush1.msra.mxu0 %v518
        %584 = vmatprep.subr.mxu0 %v521
        %585 = vmatpush1.msra.mxu0 %v520
        %586 = vmatprep.subr.mxu0 %v523
        %587 = vmatpush1.msra.mxu0 %v522
        %588 = vmatprep.subr.mxu0 %v525
        %589 = vmatpush1.msra.mxu0 %v524
        %590 = vmatprep.subr.mxu0 %v527
        %591 = vmatpush1.msra.mxu0 %v526
        %592 = vmatprep.subr.mxu0 %v529
        %593 = vmatpush1.msra.mxu0 %v528
        %594 = vmatprep.subr.mxu0 %v531
        %595 = vmatpush1.msra.mxu0 %v530
        %596 = vmatprep.subr.mxu0 %v533
        %597 = vmatpush1.msra.mxu0 %v532
        %598 = vmatprep.subr.mxu0 %v535
        %599 = vmatpush1.msra.mxu0 %v534
        %600 = vmatprep.subr.mxu0 %v537
        %601 = vmatpush1.msra.mxu0 %v536
        %602 = vmatprep.subr.mxu0 %v539
        %603 = vmatpush1.msra.mxu0 %v538
        %604 = vmatprep.subr.mxu0 %v541
        %605 = vmatpush1.msra.mxu0 %v540
        %606 = vmatprep.subr.mxu0 %v543
        %607 = vmatpush1.msra.mxu0 %v542
        %608 = vmatprep.mubr.f32.mxu0 %v341
        %609 = vmatmul.mubr.f32.gmra.mrb[0].mxu0 %v339
        %v610 = vpop.f32.mrb[0].mxu0
        %v611 = vadd.f32 0.0, %v610
        %v612 = vpop.f32.mrb[0].mxu0
        %v613 = vadd.f32 0.0, %v612
        %614 = vdwg.mxu0
        %v615 = vmax.f32 %v478, %v611
        %v616 = vmax.f32 %v479, %v613
        %617 = vst [vmem:[%s247] sm:$0xff] %v615
        %618 = vst [vmem:[%s247 + $0x8] sm:$0xff] %v616
        %s619 = sand.u32 %s139, 1
        %s620 = scalar_lea.sflag [#allocation4], %s619
        %s621 = sand.u32 %s139, 1
        %s622 = smul.addr %s621, 16
        %s623 = scalar_lea.vmem [#allocation7], %s622
        // Predicated region
        $region49: #{tpu_custom_call.1} parent=39 // pred_check
          %p624 = pneg %p149
        $region50: #{tpu_custom_call.1} parent=39 // pred_check_branch
          %626 = sbr.rel (%p624) target = $region52
        $region51: #{tpu_custom_call.1} parent=39 // pred_region
          %s628 = ssub.s32 256, 256
          %629 = vsyncadd %s620, %s628
          %s630 = smul.addr %s21, 2
          %s631 = smul.addr %s630, 128
          %s632 = scalar_lea.hbm %s5, %s631
          %s634 = sshll.u32 %s623, 4
          %s635 = int_to_ptr.vmem [resolvable:$true] %s634
          %637 = dma.vmem_to_hbm [thread:$0]  %s635, 256, %s632, %s620
        $region52: #{tpu_custom_call.1} parent=39 // pred_fallthru
          _
      $region40: #{tpu_custom_call.1} parent=5 // pred_fallthru
        _
      %p638 = scmp.le.s32.totalorder 2, %s16
      // Predicated region
      $region53: #{tpu_custom_call.1} parent=5 // pred_check
        %p639 = pneg %p638
      $region54: #{tpu_custom_call.1} parent=5 // pred_check_branch
        %641 = sbr.rel (%p639) target = $region56
      $region55: #{tpu_custom_call.1} parent=5 // pred_region
        %s642 = ssub.s32 %s16, 2
        // Predicated region
        $region57: #{tpu_custom_call.1} parent=55 // pred_check
          %p643 = pneg %p155
        $region58: #{tpu_custom_call.1} parent=55 // pred_check_branch
          %645 = sbr.rel (%p643) target = $region60
        $region59: #{tpu_custom_call.1} parent=55 // pred_region
          %s646 = sand.u32 %s140, 1
          %s647 = scalar_lea.sflag [#allocation4], %s646
          %s648 = sand.u32 %s140, 1
          %s649 = smul.addr %s648, 16
          %s650 = scalar_lea.vmem [#allocation7], %s649
          %651 = dma.done %s647, 256
        $region60: #{tpu_custom_call.1} parent=55 // pred_fallthru
          _
      $region56: #{tpu_custom_call.1} parent=5 // pred_fallthru
        _
    $region6: #{tpu_custom_call.1} parent=1 // loop_footer
      %s20 = sadd.s32 1, %s16
    $region7: #{tpu_custom_call.1} parent=1 // loop_footer_branch
      %15 = sbr.rel target = $region3
    $region8: #{tpu_custom_call.1} parent=1 // loop_exit
      _
    %652 = vsyncpa [#allocation3], 1
    %s653 = scalar_lea.sflag [#allocation3], 1
    %654 = vsyncpa %s653, 1
    %655 = vsyncpa [#allocation6], 1
    %656 = vsyncpa [#allocation4], 1
    %s657 = scalar_lea.sflag [#allocation4], 1
    %658 = vsyncpa %s657, 1

</llo_original>
